<compile_context>
chip_gen: v7x
topology: tpu7x:2x2x1
jax: 0.10.0
libtpu: 0.0.40
codegen_flags: <defaults>
</compile_context>

<pallas_src>
import functools

import jax
import jax.numpy as jnp
from jax import lax
from jax.experimental import pallas as pl
from jax.experimental.pallas import tpu as pltpu

_LANE = 128
_SUBLANE = 8


def _round_up(n, m):
    return ((n + m - 1) // m) * m


def _sigmoid(x):
    # 0.5*(tanh(0.5 x)+1): single EUP transcendental per gate.
    return 0.5 * (jnp.tanh(0.5 * x) + 1.0)


# --------------------------- one-time param prep --------------------------

def prepare_params(w_ih, w_hh, b_ih, b_hh, compute_dtype=jnp.float32):
    """One-time prep (NOT per forward call).

    Chooses the gate-column layout:
      * H % 128 == 0 -> per-gate width Hg = H (lane-aligned, no padding)
      * H  < 128     -> packed gates (Hg = H); only the total 4H width is
                        padded up to a lane multiple (cheap at small H)
      * otherwise    -> per-gate lane padding Hg = round_up(H, 128)
    Transposes weights to (K, gates), folds the two biases, and casts the
    weights to `compute_dtype` (bf16 recommended on v6e/v7x; accumulation and
    gate math stay f32 in the kernel).
    """
    fourH, _ = w_ih.shape
    H = fourH // 4
    if H % _LANE == 0 or H < _LANE:
        Hg = H
    else:
        Hg = _round_up(H, _LANE)
    Wg = _round_up(4 * Hg, _LANE)          # total gate width (lane-padded tail)

    def to_gate_cols(w):                   # (4H, K) -> (K, Wg)
        K = w.shape[1]
        w4 = jnp.asarray(w, jnp.float32).reshape(4, H, K)
        w4 = jnp.zeros((4, Hg, K), jnp.float32).at[:, :H, :].set(w4)
        wt = w4.reshape(4 * Hg, K).T                              # (K, 4*Hg)
        return jnp.pad(wt, ((0, 0), (0, Wg - 4 * Hg)))

    wih_t = to_gate_cols(w_ih).astype(compute_dtype)              # (D,  Wg)
    whh_t = to_gate_cols(w_hh)                                    # (H,  Wg)
    whh_t = jnp.pad(whh_t, ((0, Hg - H), (0, 0))).astype(compute_dtype)  # (Hg, Wg)

    b = (jnp.asarray(b_ih, jnp.float32)
         + jnp.asarray(b_hh, jnp.float32)).reshape(4, H)
    bias = jnp.zeros((4, Hg), jnp.float32).at[:, :H].set(b).reshape(1, 4 * Hg)
    bias = jnp.pad(bias, ((0, 0), (0, Wg - 4 * Hg)))              # (1, Wg) f32
    return wih_t, whh_t, bias


# ----------------------------- Pallas kernel ------------------------------

def _make_lstm_kernel(*, T, Tc, Bb, D, Hg, Wg, unroll):
    ragged = (T % Tc) != 0

    def kernel(x_ref, wih_ref, whh_ref, bias_ref, h0_ref, c0_ref,
               hn_ref, cn_ref, gx_ref, h_scr, c_scr):
        tci = pl.program_id(1)

        @pl.when(tci == 0)
        def _init():                       # fresh state for this batch block
            h_scr[...] = h0_ref[...]
            c_scr[...] = c0_ref[...]

        # Fused input projection for this time chunk (OFF the serial path):
        # one (Tc*Bb, D) @ (D, Wg) MXU pass, bias folded in, staged in VMEM so
        # every serial step only loads its Bb-row slice.
        xb = x_ref[...].reshape(Tc * Bb, D)
        gx_ref[...] = (jnp.dot(xb, wih_ref[...],
                               preferred_element_type=jnp.float32)
                       + bias_ref[...])

        whh = whh_ref[...]                 # hoisted out of the serial loop
        t0 = tci * Tc

        def step(t, carry):
            h, c = carry
            row = pl.multiple_of(t * Bb, Bb)
            # Only the recurrent matmul + gate math sits on the serial path.
            g = gx_ref[pl.ds(row, Bb), :] + jnp.dot(
                h.astype(whh.dtype), whh, preferred_element_type=jnp.float32)
            # PyTorch gate order: input, forget, cell(g), output.
            i = _sigmoid(g[:, 0 * Hg:1 * Hg])
            f = _sigmoid(g[:, 1 * Hg:2 * Hg])
            gg = jnp.tanh(g[:, 2 * Hg:3 * Hg])
            o = _sigmoid(g[:, 3 * Hg:4 * Hg])
            c_new = f * c + i * gg
            h_new = o * jnp.tanh(c_new)
            if ragged:                     # tail chunk: freeze state past T
                valid = (t0 + t) < T
                h_new = jnp.where(valid, h_new, h)
                c_new = jnp.where(valid, c_new, c)
            return h_new, c_new

        h, c = lax.fori_loop(0, Tc, step, (h_scr[...], c_scr[...]),
                             unroll=unroll)
        h_scr[...] = h
        c_scr[...] = c
        hn_ref[...] = h
        cn_ref[...] = c

    return kernel


# ------------------------------ forward -----------------------------------

@functools.partial(jax.jit, static_argnames=("time_chunk", "batch_block"))
def decoder_rnn_forward(x, h0, c0, wih_t, whh_t, bias, *,
                        time_chunk=None, batch_block=None):
    """DecoderRNN.forward(x, h, c) -> (hn, cn).

    x:      (B, T, D)   batch_first, D = input_size + hidden_size
    h0, c0: (1, B, H)   num_layers = 1
    wih_t/whh_t/bias:   outputs of prepare_params()
    returns (hn, cn), each (1, B, H)
    """
    B, T, D = x.shape
    H = h0.shape[-1]
    Hs, Wg = whh_t.shape                   # state width (= per-gate width Hg)
    Hg = Hs
    cdtype = wih_t.dtype
    x_bytes = jnp.dtype(cdtype).itemsize

    # Batch padding / blocking (sublane-aligned; bf16 packs 2 rows / sublane).
    sub = _SUBLANE if x_bytes >= 4 else 2 * _SUBLANE
    if batch_block is None:
        Bp = _round_up(B, sub)
        Bb = Bp                            # pass batch_block=Bp//2 to split the
    else:                                  # batch over v7x's two TensorCores
        Bb = _round_up(batch_block, sub)
        Bp = _round_up(B, Bb)
    NB = Bp // Bb

    # Time chunk sized so the streaming footprint (double-buffered x block +
    # staged gate projections) stays well inside every generation's scoped
    # VMEM (v5e 16 MiB default, v6e/v7x 32 MiB; v7x only 64 MiB physical).
    if time_chunk is None:
        per_t = Bb * (2 * D * x_bytes + Wg * 4)
        time_chunk = max(1, (8 * 1024 * 1024) // per_t)
    Tc = int(min(T, time_chunk))
    NT = (T + Tc - 1) // Tc

    # Unroll the serial loop only as far as the 64-vreg file allows.
    gate_vregs = max(1, (Bb * Wg) // (_SUBLANE * _LANE))
    unroll = int(max(1, min(Tc, 8, 32 // gate_vregs)))

    # Time-major, batch-padded input stream in the compute dtype.
    x_t = jnp.swapaxes(x.astype(cdtype), 0, 1)                    # (T, B, D)
    x_t = jnp.pad(x_t, ((0, 0), (0, Bp - B), (0, 0)))             # (T, Bp, D)
    h0_p = jnp.pad(h0[0].astype(jnp.float32), ((0, Bp - B), (0, Hs - H)))
    c0_p = jnp.pad(c0[0].astype(jnp.float32), ((0, Bp - B), (0, Hs - H)))

    kernel = _make_lstm_kernel(T=T, Tc=Tc, Bb=Bb, D=D, Hg=Hg, Wg=Wg,
                               unroll=unroll)

    # Explicit VMEM budget with headroom (capped for v7x's 64 MiB physical).
    est = (2 * Tc * Bb * D * x_bytes            # double-buffered x chunks
           + Tc * Bb * Wg * 4                   # staged gate projections
           + 2 * (D + Hs + 1) * Wg * 4          # resident weights + bias
           + 10 * Bb * Hs * 4)                  # state scratch + h/c blocks
    vmem_limit = int(min(48 * 1024 * 1024, max(32 * 1024 * 1024, 2 * est)))

    hn_p, cn_p = pl.pallas_call(
        kernel,
        out_shape=(
            jax.ShapeDtypeStruct((Bp, Hs), jnp.float32),
            jax.ShapeDtypeStruct((Bp, Hs), jnp.float32),
        ),
        grid=(NB, NT),
        in_specs=[
            pl.BlockSpec((Tc, Bb, D), lambda b, t: (t, b, 0)),    # x chunk
            pl.BlockSpec((D, Wg), lambda b, t: (0, 0)),           # W_ih^T (resident)
            pl.BlockSpec((Hs, Wg), lambda b, t: (0, 0)),          # W_hh^T (resident)
            pl.BlockSpec((1, Wg), lambda b, t: (0, 0)),           # fused bias
            pl.BlockSpec((Bb, Hs), lambda b, t: (b, 0)),          # h0
            pl.BlockSpec((Bb, Hs), lambda b, t: (b, 0)),          # c0
        ],
        out_specs=(
            pl.BlockSpec((Bb, Hs), lambda b, t: (b, 0)),          # hn
            pl.BlockSpec((Bb, Hs), lambda b, t: (b, 0)),          # cn
        ),
        scratch_shapes=[
            pltpu.VMEM((Tc * Bb, Wg), jnp.float32),               # staged x @ W_ih^T
            pltpu.VMEM((Bb, Hs), jnp.float32),                    # h carry
            pltpu.VMEM((Bb, Hs), jnp.float32),                    # c carry
        ],
        input_output_aliases={4: 0, 5: 1},                        # h0->hn, c0->cn
        compiler_params=pltpu.CompilerParams(
            dimension_semantics=("parallel", "arbitrary"),
            vmem_limit_bytes=vmem_limit,
        ),
    )(x_t, wih_t, whh_t, bias, h0_p, c0_p)

    return hn_p[None, :B, :H], cn_p[None, :B, :H]


# --------------------------- pure-JAX reference ---------------------------

def _ref_lstm(x, h0, c0, w_ih, w_hh, b_ih, b_hh):
    wih_t = w_ih.T
    whh_t = w_hh.T
    b = b_ih + b_hh
    H = h0.shape[-1]

    def step(carry, xt):
        h, c = carry
        gates = xt @ wih_t + h @ whh_t + b
        i = jax.nn.sigmoid(gates[:, 0 * H:1 * H])
        f = jax.nn.sigmoid(gates[:, 1 * H:2 * H])
        g = jnp.tanh(gates[:, 2 * H:3 * H])
        o = jax.nn.sigmoid(gates[:, 3 * H:4 * H])
        c = f * c + i * g
        h = o * jnp.tanh(c)
        return (h, c), None

    (h, c), _ = lax.scan(step, (h0[0], c0[0]), jnp.swapaxes(x, 0, 1))
    return h[None], c[None]


# ------------------------- deterministic params ---------------------------

def _orthogonal(key, shape):
    """Deterministic orthogonal init (matches nn.init.orthogonal_ semantics)."""
    rows, cols = shape
    flip = rows < cols
    n, m = (cols, rows) if flip else (rows, cols)
    a = jax.random.normal(key, (n, m), dtype=jnp.float32)
    q, r = jnp.linalg.qr(a)
    q = q * jnp.sign(jnp.diagonal(r))[None, :]
    return q.T if flip else q


def make_params(key, input_size, hidden_size):
    D = input_size + hidden_size
    H = hidden_size
    k1, k2 = jax.random.split(key)
    w_ih = _orthogonal(k1, (4 * H, D))          # orthogonal_ like init_weights()
    w_hh = _orthogonal(k2, (4 * H, H))
    b_ih = jnp.zeros((4 * H,), jnp.float32)     # constant_(0)
    b_hh = jnp.zeros((4 * H,), jnp.float32)
    return w_ih, w_hh, b_ih, b_hh


# --------------------------------- main -----------------------------------

if __name__ == "__main__":
    # Shapes consistent with the module's forward():
    #   x: (batch, seq, input_size + hidden_size), h/c: (num_layers, batch, hidden)
    batch, seq = 2, 8
    input_size, hidden_size = 10, 32
    D = input_size + hidden_size

    key = jax.random.PRNGKey(0)
    kx, kh, kc, kp = jax.random.split(key, 4)

    x = jax.random.normal(kx, (batch, seq, D), dtype=jnp.float32)
    h0 = jax.random.normal(kh, (1, batch, hidden_size), dtype=jnp.float32)
    c0 = jax.random.normal(kc, (1, batch, hidden_size), dtype=jnp.float32)
    w_ih, w_hh, b_ih, b_hh = make_params(kp, input_size, hidden_size)

    hn_ref, cn_ref = _ref_lstm(x, h0, c0, w_ih, w_hh, b_ih, b_hh)

    # ---- f32 weights: exact-parity path (time_chunk=4 -> 2 pipelined chunks,
    #      exercising the cross-chunk state carry).
    wih_t, whh_t, bias = prepare_params(w_ih, w_hh, b_ih, b_hh,
                                        compute_dtype=jnp.float32)
    hn, cn = decoder_rnn_forward(x, h0, c0, wih_t, whh_t, bias, time_chunk=4)
    jax.block_until_ready((hn, cn))
    assert hn.shape == (1, batch, hidden_size) and cn.shape == (1, batch, hidden_size)
    assert jnp.allclose(hn, hn_ref, atol=1e-4, rtol=1e-4), float(jnp.max(jnp.abs(hn - hn_ref)))
    assert jnp.allclose(cn, cn_ref, atol=1e-4, rtol=1e-4), float(jnp.max(jnp.abs(cn - cn_ref)))

    # ---- bf16 weights / bf16 x-stream: MXU-native path (f32 accumulation and
    #      f32 gate math), loose tolerance only because of bf16 quantization.
    wih_b, whh_b, bias_b = prepare_params(w_ih, w_hh, b_ih, b_hh,
                                          compute_dtype=jnp.bfloat16)
    hn_b, cn_b = decoder_rnn_forward(x, h0, c0, wih_b, whh_b, bias_b,
                                     time_chunk=4)
    jax.block_until_ready((hn_b, cn_b))
    assert bool(jnp.all(jnp.isfinite(hn_b))) and bool(jnp.all(jnp.isfinite(cn_b)))
    assert jnp.allclose(hn_b, hn_ref, atol=2e-1), float(jnp.max(jnp.abs(hn_b - hn_ref)))
    assert jnp.allclose(cn_b, cn_ref, atol=2e-1), float(jnp.max(jnp.abs(cn_b - cn_ref)))

    print("KERNEL_OK")
</pallas_src>

<mosaic_0001>
module attributes {stable_mosaic.version = 11 : i64} {
  func.func @kernel(%arg0: i32, %arg1: i32, %arg2: memref<4x8x42xf32, #tpu.memory_space<vmem>>, %arg3: memref<42x128xf32, #tpu.memory_space<vmem>>, %arg4: memref<32x128xf32, #tpu.memory_space<vmem>>, %arg5: memref<1x128xf32, #tpu.memory_space<vmem>>, %arg6: memref<8x32xf32, #tpu.memory_space<vmem>>, %arg7: memref<8x32xf32, #tpu.memory_space<vmem>>, %arg8: memref<8x32xf32, #tpu.memory_space<vmem>>, %arg9: memref<8x32xf32, #tpu.memory_space<vmem>>, %arg10: memref<32x128xf32, #tpu.memory_space<vmem>>, %arg11: memref<8x32xf32, #tpu.memory_space<vmem>>, %arg12: memref<8x32xf32, #tpu.memory_space<vmem>>) attributes {dimension_semantics = [#tpu.dimension_semantics<parallel>, #tpu.dimension_semantics<arbitrary>], iteration_bounds = array<i64: 1, 2>, scalar_prefetch = 0 : i64, scratch_operands = 3 : i64, tpu.core_type = #tpu.core_type<tc>, window_params = [{transform_indices = @transform_0, window_bounds = array<i64: 4, 8, 42>}, {pipeline_mode = #tpu.pipeline_mode<synchronous>, transform_indices = @transform_1, window_bounds = array<i64: 42, 128>}, {pipeline_mode = #tpu.pipeline_mode<synchronous>, transform_indices = @transform_2, window_bounds = array<i64: 32, 128>}, {pipeline_mode = #tpu.pipeline_mode<synchronous>, transform_indices = @transform_3, window_bounds = array<i64: 1, 128>}, {transform_indices = @transform_4, window_bounds = array<i64: 8, 32>}, {transform_indices = @transform_5, window_bounds = array<i64: 8, 32>}, {transform_indices = @transform_6, window_bounds = array<i64: 8, 32>}, {transform_indices = @transform_7, window_bounds = array<i64: 8, 32>}]} {
    %c0_i32 = arith.constant 0 : i32
    %0 = arith.cmpi eq, %arg1, %c0_i32 : i32
    %1 = arith.extui %0 : i1 to i32
    %c0_i32_0 = arith.constant 0 : i32
    %2 = arith.cmpi ne, %1, %c0_i32_0 : i32
    scf.if %2 {
      %c0_71 = arith.constant 0 : index
      %c0_72 = arith.constant 0 : index
      %166 = vector.load %arg6[%c0_71, %c0_72] : memref<8x32xf32, #tpu.memory_space<vmem>>, vector<8x32xf32>
      %c0_73 = arith.constant 0 : index
      %c0_74 = arith.constant 0 : index
      %167 = vector.load %arg11[%c0_73, %c0_74] : memref<8x32xf32, #tpu.memory_space<vmem>>, vector<8x32xf32>
      tpu.vector_store %arg11[%c0_73, %c0_74], %166 {strides = array<i32>} : memref<8x32xf32, #tpu.memory_space<vmem>>, vector<8x32xf32>,
      %c0_75 = arith.constant 0 : index
      %c0_76 = arith.constant 0 : index
      %168 = vector.load %arg7[%c0_75, %c0_76] : memref<8x32xf32, #tpu.memory_space<vmem>>, vector<8x32xf32>
      %c0_77 = arith.constant 0 : index
      %c0_78 = arith.constant 0 : index
      %169 = vector.load %arg12[%c0_77, %c0_78] : memref<8x32xf32, #tpu.memory_space<vmem>>, vector<8x32xf32>
      tpu.vector_store %arg12[%c0_77, %c0_78], %168 {strides = array<i32>} : memref<8x32xf32, #tpu.memory_space<vmem>>, vector<8x32xf32>,
    } else {
    }
    %c0 = arith.constant 0 : index
    %c0_1 = arith.constant 0 : index
    %c0_2 = arith.constant 0 : index
    %3 = vector.load %arg2[%c0, %c0_1, %c0_2] : memref<4x8x42xf32, #tpu.memory_space<vmem>>, vector<4x8x42xf32>
    %4 = vector.shape_cast %3 : vector<4x8x42xf32> to vector<32x42xf32>
    %c0_3 = arith.constant 0 : index
    %c0_4 = arith.constant 0 : index
    %5 = vector.load %arg3[%c0_3, %c0_4] : memref<42x128xf32, #tpu.memory_space<vmem>>, vector<42x128xf32>
    %cst = arith.constant dense<0.000000e+00> : vector<32x128xf32>
    %6 = tpu.matmul %4, %5, %cst {dimension_numbers = #tpu.dot_dimension_numbers<[1], [0], [0], [1], [0, 0, 1, 1], [], []>} : vector<32x42xf32>, vector<42x128xf32>, vector<32x128xf32> -> vector<32x128xf32>
    %c0_5 = arith.constant 0 : index
    %c0_6 = arith.constant 0 : index
    %7 = vector.load %arg5[%c0_5, %c0_6] : memref<1x128xf32, #tpu.memory_space<vmem>>, vector<1x128xf32>
    %8 = vector.broadcast %7 : vector<1x128xf32> to vector<32x128xf32>
    %9 = arith.addf %6, %8 : vector<32x128xf32>
    %c0_7 = arith.constant 0 : index
    %c0_8 = arith.constant 0 : index
    %10 = vector.load %arg10[%c0_7, %c0_8] : memref<32x128xf32, #tpu.memory_space<vmem>>, vector<32x128xf32>
    tpu.vector_store %arg10[%c0_7, %c0_8], %9 {strides = array<i32>} : memref<32x128xf32, #tpu.memory_space<vmem>>, vector<32x128xf32>,
    %c0_9 = arith.constant 0 : index
    %c0_10 = arith.constant 0 : index
    %11 = vector.load %arg4[%c0_9, %c0_10] : memref<32x128xf32, #tpu.memory_space<vmem>>, vector<32x128xf32>
    %c0_11 = arith.constant 0 : index
    %c0_12 = arith.constant 0 : index
    %12 = vector.load %arg11[%c0_11, %c0_12] : memref<8x32xf32, #tpu.memory_space<vmem>>, vector<8x32xf32>
    %c0_13 = arith.constant 0 : index
    %c0_14 = arith.constant 0 : index
    %13 = vector.load %arg12[%c0_13, %c0_14] : memref<8x32xf32, #tpu.memory_space<vmem>>, vector<8x32xf32>
    %c0_i32_15 = arith.constant 0 : i32
    %c8_i32 = arith.constant 8 : i32
    %14 = arith.muli %c0_i32_15, %c8_i32 : i32
    %15 = tpu.assume_multiple %14, 8 : i32
    %16 = arith.index_cast %15 : i32 to index
    %c0_16 = arith.constant 0 : index
    %17 = vector.load %arg10[%16, %c0_16] : memref<32x128xf32, #tpu.memory_space<vmem>>, vector<8x128xf32>
    %cst_17 = arith.constant dense<0.000000e+00> : vector<8x128xf32>
    %18 = tpu.matmul %12, %11, %cst_17 {dimension_numbers = #tpu.dot_dimension_numbers<[1], [0], [0], [1], [0, 0, 1, 1], [], []>} : vector<8x32xf32>, vector<32x128xf32>, vector<8x128xf32> -> vector<8x128xf32>
    %19 = arith.addf %17, %18 : vector<8x128xf32>
    %20 = vector.extract_strided_slice %19 {offsets = [0, 0], sizes = [8, 32], strides = [1, 1]} : vector<8x128xf32> to vector<8x32xf32>
    %cst_18 = arith.constant 5.000000e-01 : f32
    %21 = vector.broadcast %cst_18 : f32 to vector<8x32xf32>
    %22 = arith.mulf %21, %20 : vector<8x32xf32>
    %23 = math.tanh %22 : vector<8x32xf32>
    %cst_19 = arith.constant 1.000000e+00 : f32
    %24 = vector.broadcast %cst_19 : f32 to vector<8x32xf32>
    %25 = arith.addf %23, %24 : vector<8x32xf32>
    %cst_20 = arith.constant 5.000000e-01 : f32
    %26 = vector.broadcast %cst_20 : f32 to vector<8x32xf32>
    %27 = arith.mulf %26, %25 : vector<8x32xf32>
    %28 = vector.extract_strided_slice %19 {offsets = [0, 32], sizes = [8, 32], strides = [1, 1]} : vector<8x128xf32> to vector<8x32xf32>
    %cst_21 = arith.constant 5.000000e-01 : f32
    %29 = vector.broadcast %cst_21 : f32 to vector<8x32xf32>
    %30 = arith.mulf %29, %28 : vector<8x32xf32>
    %31 = math.tanh %30 : vector<8x32xf32>
    %cst_22 = arith.constant 1.000000e+00 : f32
    %32 = vector.broadcast %cst_22 : f32 to vector<8x32xf32>
    %33 = arith.addf %31, %32 : vector<8x32xf32>
    %cst_23 = arith.constant 5.000000e-01 : f32
    %34 = vector.broadcast %cst_23 : f32 to vector<8x32xf32>
    %35 = arith.mulf %34, %33 : vector<8x32xf32>
    %36 = vector.extract_strided_slice %19 {offsets = [0, 64], sizes = [8, 32], strides = [1, 1]} : vector<8x128xf32> to vector<8x32xf32>
    %37 = math.tanh %36 : vector<8x32xf32>
    %38 = vector.extract_strided_slice %19 {offsets = [0, 96], sizes = [8, 32], strides = [1, 1]} : vector<8x128xf32> to vector<8x32xf32>
    %cst_24 = arith.constant 5.000000e-01 : f32
    %39 = vector.broadcast %cst_24 : f32 to vector<8x32xf32>
    %40 = arith.mulf %39, %38 : vector<8x32xf32>
    %41 = math.tanh %40 : vector<8x32xf32>
    %cst_25 = arith.constant 1.000000e+00 : f32
    %42 = vector.broadcast %cst_25 : f32 to vector<8x32xf32>
    %43 = arith.addf %41, %42 : vector<8x32xf32>
    %cst_26 = arith.constant 5.000000e-01 : f32
    %44 = vector.broadcast %cst_26 : f32 to vector<8x32xf32>
    %45 = arith.mulf %44, %43 : vector<8x32xf32>
    %46 = arith.mulf %35, %13 : vector<8x32xf32>
    %47 = arith.mulf %27, %37 : vector<8x32xf32>
    %48 = arith.addf %46, %47 : vector<8x32xf32>
    %49 = math.tanh %48 : vector<8x32xf32>
    %50 = arith.mulf %45, %49 : vector<8x32xf32>
    %c1_i32 = arith.constant 1 : i32
    %c8_i32_27 = arith.constant 8 : i32
    %51 = arith.muli %c1_i32, %c8_i32_27 : i32
    %52 = tpu.assume_multiple %51, 8 : i32
    %53 = arith.index_cast %52 : i32 to index
    %c0_28 = arith.constant 0 : index
    %54 = vector.load %arg10[%53, %c0_28] : memref<32x128xf32, #tpu.memory_space<vmem>>, vector<8x128xf32>
    %cst_29 = arith.constant dense<0.000000e+00> : vector<8x128xf32>
    %55 = tpu.matmul %50, %11, %cst_29 {dimension_numbers = #tpu.dot_dimension_numbers<[1], [0], [0], [1], [0, 0, 1, 1], [], []>} : vector<8x32xf32>, vector<32x128xf32>, vector<8x128xf32> -> vector<8x128xf32>
    %56 = arith.addf %54, %55 : vector<8x128xf32>
    %57 = vector.extract_strided_slice %56 {offsets = [0, 0], sizes = [8, 32], strides = [1, 1]} : vector<8x128xf32> to vector<8x32xf32>
    %cst_30 = arith.constant 5.000000e-01 : f32
    %58 = vector.broadcast %cst_30 : f32 to vector<8x32xf32>
    %59 = arith.mulf %58, %57 : vector<8x32xf32>
    %60 = math.tanh %59 : vector<8x32xf32>
    %cst_31 = arith.constant 1.000000e+00 : f32
    %61 = vector.broadcast %cst_31 : f32 to vector<8x32xf32>
    %62 = arith.addf %60, %61 : vector<8x32xf32>
    %cst_32 = arith.constant 5.000000e-01 : f32
    %63 = vector.broadcast %cst_32 : f32 to vector<8x32xf32>
    %64 = arith.mulf %63, %62 : vector<8x32xf32>
    %65 = vector.extract_strided_slice %56 {offsets = [0, 32], sizes = [8, 32], strides = [1, 1]} : vector<8x128xf32> to vector<8x32xf32>
    %cst_33 = arith.constant 5.000000e-01 : f32
    %66 = vector.broadcast %cst_33 : f32 to vector<8x32xf32>
    %67 = arith.mulf %66, %65 : vector<8x32xf32>
    %68 = math.tanh %67 : vector<8x32xf32>
    %cst_34 = arith.constant 1.000000e+00 : f32
    %69 = vector.broadcast %cst_34 : f32 to vector<8x32xf32>
    %70 = arith.addf %68, %69 : vector<8x32xf32>
    %cst_35 = arith.constant 5.000000e-01 : f32
    %71 = vector.broadcast %cst_35 : f32 to vector<8x32xf32>
    %72 = arith.mulf %71, %70 : vector<8x32xf32>
    %73 = vector.extract_strided_slice %56 {offsets = [0, 64], sizes = [8, 32], strides = [1, 1]} : vector<8x128xf32> to vector<8x32xf32>
    %74 = math.tanh %73 : vector<8x32xf32>
    %75 = vector.extract_strided_slice %56 {offsets = [0, 96], sizes = [8, 32], strides = [1, 1]} : vector<8x128xf32> to vector<8x32xf32>
    %cst_36 = arith.constant 5.000000e-01 : f32
    %76 = vector.broadcast %cst_36 : f32 to vector<8x32xf32>
    %77 = arith.mulf %76, %75 : vector<8x32xf32>
    %78 = math.tanh %77 : vector<8x32xf32>
    %cst_37 = arith.constant 1.000000e+00 : f32
    %79 = vector.broadcast %cst_37 : f32 to vector<8x32xf32>
    %80 = arith.addf %78, %79 : vector<8x32xf32>
    %cst_38 = arith.constant 5.000000e-01 : f32
    %81 = vector.broadcast %cst_38 : f32 to vector<8x32xf32>
    %82 = arith.mulf %81, %80 : vector<8x32xf32>
    %83 = arith.mulf %72, %48 : vector<8x32xf32>
    %84 = arith.mulf %64, %74 : vector<8x32xf32>
    %85 = arith.addf %83, %84 : vector<8x32xf32>
    %86 = math.tanh %85 : vector<8x32xf32>
    %87 = arith.mulf %82, %86 : vector<8x32xf32>
    %c2_i32 = arith.constant 2 : i32
    %c8_i32_39 = arith.constant 8 : i32
    %88 = arith.muli %c2_i32, %c8_i32_39 : i32
    %89 = tpu.assume_multiple %88, 8 : i32
    %90 = arith.index_cast %89 : i32 to index
    %c0_40 = arith.constant 0 : index
    %91 = vector.load %arg10[%90, %c0_40] : memref<32x128xf32, #tpu.memory_space<vmem>>, vector<8x128xf32>
    %cst_41 = arith.constant dense<0.000000e+00> : vector<8x128xf32>
    %92 = tpu.matmul %87, %11, %cst_41 {dimension_numbers = #tpu.dot_dimension_numbers<[1], [0], [0], [1], [0, 0, 1, 1], [], []>} : vector<8x32xf32>, vector<32x128xf32>, vector<8x128xf32> -> vector<8x128xf32>
    %93 = arith.addf %91, %92 : vector<8x128xf32>
    %94 = vector.extract_strided_slice %93 {offsets = [0, 0], sizes = [8, 32], strides = [1, 1]} : vector<8x128xf32> to vector<8x32xf32>
    %cst_42 = arith.constant 5.000000e-01 : f32
    %95 = vector.broadcast %cst_42 : f32 to vector<8x32xf32>
    %96 = arith.mulf %95, %94 : vector<8x32xf32>
    %97 = math.tanh %96 : vector<8x32xf32>
    %cst_43 = arith.constant 1.000000e+00 : f32
    %98 = vector.broadcast %cst_43 : f32 to vector<8x32xf32>
    %99 = arith.addf %97, %98 : vector<8x32xf32>
    %cst_44 = arith.constant 5.000000e-01 : f32
    %100 = vector.broadcast %cst_44 : f32 to vector<8x32xf32>
    %101 = arith.mulf %100, %99 : vector<8x32xf32>
    %102 = vector.extract_strided_slice %93 {offsets = [0, 32], sizes = [8, 32], strides = [1, 1]} : vector<8x128xf32> to vector<8x32xf32>
    %cst_45 = arith.constant 5.000000e-01 : f32
    %103 = vector.broadcast %cst_45 : f32 to vector<8x32xf32>
    %104 = arith.mulf %103, %102 : vector<8x32xf32>
    %105 = math.tanh %104 : vector<8x32xf32>
    %cst_46 = arith.constant 1.000000e+00 : f32
    %106 = vector.broadcast %cst_46 : f32 to vector<8x32xf32>
    %107 = arith.addf %105, %106 : vector<8x32xf32>
    %cst_47 = arith.constant 5.000000e-01 : f32
    %108 = vector.broadcast %cst_47 : f32 to vector<8x32xf32>
    %109 = arith.mulf %108, %107 : vector<8x32xf32>
    %110 = vector.extract_strided_slice %93 {offsets = [0, 64], sizes = [8, 32], strides = [1, 1]} : vector<8x128xf32> to vector<8x32xf32>
    %111 = math.tanh %110 : vector<8x32xf32>
    %112 = vector.extract_strided_slice %93 {offsets = [0, 96], sizes = [8, 32], strides = [1, 1]} : vector<8x128xf32> to vector<8x32xf32>
    %cst_48 = arith.constant 5.000000e-01 : f32
    %113 = vector.broadcast %cst_48 : f32 to vector<8x32xf32>
    %114 = arith.mulf %113, %112 : vector<8x32xf32>
    %115 = math.tanh %114 : vector<8x32xf32>
    %cst_49 = arith.constant 1.000000e+00 : f32
    %116 = vector.broadcast %cst_49 : f32 to vector<8x32xf32>
    %117 = arith.addf %115, %116 : vector<8x32xf32>
    %cst_50 = arith.constant 5.000000e-01 : f32
    %118 = vector.broadcast %cst_50 : f32 to vector<8x32xf32>
    %119 = arith.mulf %118, %117 : vector<8x32xf32>
    %120 = arith.mulf %109, %85 : vector<8x32xf32>
    %121 = arith.mulf %101, %111 : vector<8x32xf32>
    %122 = arith.addf %120, %121 : vector<8x32xf32>
    %123 = math.tanh %122 : vector<8x32xf32>
    %124 = arith.mulf %119, %123 : vector<8x32xf32>
    %c3_i32 = arith.constant 3 : i32
    %c8_i32_51 = arith.constant 8 : i32
    %125 = arith.muli %c3_i32, %c8_i32_51 : i32
    %126 = tpu.assume_multiple %125, 8 : i32
    %127 = arith.index_cast %126 : i32 to index
    %c0_52 = arith.constant 0 : index
    %128 = vector.load %arg10[%127, %c0_52] : memref<32x128xf32, #tpu.memory_space<vmem>>, vector<8x128xf32>
    %cst_53 = arith.constant dense<0.000000e+00> : vector<8x128xf32>
    %129 = tpu.matmul %124, %11, %cst_53 {dimension_numbers = #tpu.dot_dimension_numbers<[1], [0], [0], [1], [0, 0, 1, 1], [], []>} : vector<8x32xf32>, vector<32x128xf32>, vector<8x128xf32> -> vector<8x128xf32>
    %130 = arith.addf %128, %129 : vector<8x128xf32>
    %131 = vector.extract_strided_slice %130 {offsets = [0, 0], sizes = [8, 32], strides = [1, 1]} : vector<8x128xf32> to vector<8x32xf32>
    %cst_54 = arith.constant 5.000000e-01 : f32
    %132 = vector.broadcast %cst_54 : f32 to vector<8x32xf32>
    %133 = arith.mulf %132, %131 : vector<8x32xf32>
    %134 = math.tanh %133 : vector<8x32xf32>
    %cst_55 = arith.constant 1.000000e+00 : f32
    %135 = vector.broadcast %cst_55 : f32 to vector<8x32xf32>
    %136 = arith.addf %134, %135 : vector<8x32xf32>
    %cst_56 = arith.constant 5.000000e-01 : f32
    %137 = vector.broadcast %cst_56 : f32 to vector<8x32xf32>
    %138 = arith.mulf %137, %136 : vector<8x32xf32>
    %139 = vector.extract_strided_slice %130 {offsets = [0, 32], sizes = [8, 32], strides = [1, 1]} : vector<8x128xf32> to vector<8x32xf32>
    %cst_57 = arith.constant 5.000000e-01 : f32
    %140 = vector.broadcast %cst_57 : f32 to vector<8x32xf32>
    %141 = arith.mulf %140, %139 : vector<8x32xf32>
    %142 = math.tanh %141 : vector<8x32xf32>
    %cst_58 = arith.constant 1.000000e+00 : f32
    %143 = vector.broadcast %cst_58 : f32 to vector<8x32xf32>
    %144 = arith.addf %142, %143 : vector<8x32xf32>
    %cst_59 = arith.constant 5.000000e-01 : f32
    %145 = vector.broadcast %cst_59 : f32 to vector<8x32xf32>
    %146 = arith.mulf %145, %144 : vector<8x32xf32>
    %147 = vector.extract_strided_slice %130 {offsets = [0, 64], sizes = [8, 32], strides = [1, 1]} : vector<8x128xf32> to vector<8x32xf32>
    %148 = math.tanh %147 : vector<8x32xf32>
    %149 = vector.extract_strided_slice %130 {offsets = [0, 96], sizes = [8, 32], strides = [1, 1]} : vector<8x128xf32> to vector<8x32xf32>
    %cst_60 = arith.constant 5.000000e-01 : f32
    %150 = vector.broadcast %cst_60 : f32 to vector<8x32xf32>
    %151 = arith.mulf %150, %149 : vector<8x32xf32>
    %152 = math.tanh %151 : vector<8x32xf32>
    %cst_61 = arith.constant 1.000000e+00 : f32
    %153 = vector.broadcast %cst_61 : f32 to vector<8x32xf32>
    %154 = arith.addf %152, %153 : vector<8x32xf32>
    %cst_62 = arith.constant 5.000000e-01 : f32
    %155 = vector.broadcast %cst_62 : f32 to vector<8x32xf32>
    %156 = arith.mulf %155, %154 : vector<8x32xf32>
    %157 = arith.mulf %146, %122 : vector<8x32xf32>
    %158 = arith.mulf %138, %148 : vector<8x32xf32>
    %159 = arith.addf %157, %158 : vector<8x32xf32>
    %160 = math.tanh %159 : vector<8x32xf32>
    %161 = arith.mulf %156, %160 : vector<8x32xf32>
    %c4_i32 = arith.constant 4 : i32
    %c0_63 = arith.constant 0 : index
    %c0_64 = arith.constant 0 : index
    %162 = vector.load %arg11[%c0_63, %c0_64] : memref<8x32xf32, #tpu.memory_space<vmem>>, vector<8x32xf32>
    tpu.vector_store %arg11[%c0_63, %c0_64], %161 {strides = array<i32>} : memref<8x32xf32, #tpu.memory_space<vmem>>, vector<8x32xf32>,
    %c0_65 = arith.constant 0 : index
    %c0_66 = arith.constant 0 : index
    %163 = vector.load %arg12[%c0_65, %c0_66] : memref<8x32xf32, #tpu.memory_space<vmem>>, vector<8x32xf32>
    tpu.vector_store %arg12[%c0_65, %c0_66], %159 {strides = array<i32>} : memref<8x32xf32, #tpu.memory_space<vmem>>, vector<8x32xf32>,
    %c0_67 = arith.constant 0 : index
    %c0_68 = arith.constant 0 : index
    %164 = vector.load %arg8[%c0_67, %c0_68] : memref<8x32xf32, #tpu.memory_space<vmem>>, vector<8x32xf32>
    tpu.vector_store %arg8[%c0_67, %c0_68], %161 {strides = array<i32>} : memref<8x32xf32, #tpu.memory_space<vmem>>, vector<8x32xf32>,
    %c0_69 = arith.constant 0 : index
    %c0_70 = arith.constant 0 : index
    %165 = vector.load %arg9[%c0_69, %c0_70] : memref<8x32xf32, #tpu.memory_space<vmem>>, vector<8x32xf32>
    tpu.vector_store %arg9[%c0_69, %c0_70], %159 {strides = array<i32>} : memref<8x32xf32, #tpu.memory_space<vmem>>, vector<8x32xf32>,
    return
  }
  func.func @transform_0(%arg0: i32, %arg1: i32) -> (i32, i32, i32) {
    %c0_i32 = arith.constant 0 : i32
    %c0_i32_0 = arith.constant 0 : i32
    return %arg1, %arg0, %c0_i32 : i32, i32, i32
  }
  func.func @transform_1(%arg0: i32, %arg1: i32) -> (i32, i32) {
    %c0_i32 = arith.constant 0 : i32
    %c0_i32_0 = arith.constant 0 : i32
    %c0_i32_1 = arith.constant 0 : i32
    return %c0_i32, %c0_i32_0 : i32, i32
  }
  func.func @transform_2(%arg0: i32, %arg1: i32) -> (i32, i32) {
    %c0_i32 = arith.constant 0 : i32
    %c0_i32_0 = arith.constant 0 : i32
    %c0_i32_1 = arith.constant 0 : i32
    return %c0_i32, %c0_i32_0 : i32, i32
  }
  func.func @transform_3(%arg0: i32, %arg1: i32) -> (i32, i32) {
    %c0_i32 = arith.constant 0 : i32
    %c0_i32_0 = arith.constant 0 : i32
    %c0_i32_1 = arith.constant 0 : i32
    return %c0_i32, %c0_i32_0 : i32, i32
  }
  func.func @transform_4(%arg0: i32, %arg1: i32) -> (i32, i32) {
    %c0_i32 = arith.constant 0 : i32
    %c0_i32_0 = arith.constant 0 : i32
    return %arg0, %c0_i32 : i32, i32
  }
  func.func @transform_5(%arg0: i32, %arg1: i32) -> (i32, i32) {
    %c0_i32 = arith.constant 0 : i32
    %c0_i32_0 = arith.constant 0 : i32
    return %arg0, %c0_i32 : i32, i32
  }
  func.func @transform_6(%arg0: i32, %arg1: i32) -> (i32, i32) {
    %c0_i32 = arith.constant 0 : i32
    %c0_i32_0 = arith.constant 0 : i32
    return %arg0, %c0_i32 : i32, i32
  }
  func.func @transform_7(%arg0: i32, %arg1: i32) -> (i32, i32) {
    %c0_i32 = arith.constant 0 : i32
    %c0_i32_0 = arith.constant 0 : i32
    return %arg0, %c0_i32 : i32, i32
  }
}

</mosaic_0001>

<llo_original>
// kernel: decoder_rnn_forward.1
$region0: #{decoder_rnn_forward.1}
  #allocation0 [shape = 'u32[]', space=smem, size = 0x4, offset = 0x4, fixed_abs, tag = 'smem constant byte address 0x4 - core index']
  #allocation1 [shape = 'u32[144,128]{1,0:T(1,128)}', space=vmem, size = 0x12000, scoped, tag = 'internal scratch']
  #allocation2 [shape = 'f32[32,128]{1,0:T(8,128)}', space=vmem, size = 0x4000, scoped, tag = 'scratch operand']
  #allocation3 [shape = 'f32[8,32]{1,0:T(8,128)}', space=vmem, size = 0x1000, scoped, tag = 'scratch operand']
  #allocation4 [shape = 'f32[8,32]{1,0:T(8,128)}', space=vmem, size = 0x1000, scoped, tag = 'scratch operand']
  %s0 = inlined_call_operand.vmem [shape: f32[8,8,42], index: 0, kind: input, shape index: {}]
  %s1 = inlined_call_operand.vmem [shape: f32[42,128], index: 1, kind: input, shape index: {}]
  %s2 = inlined_call_operand.vmem [shape: f32[32,128], index: 2, kind: input, shape index: {}]
  %s3 = inlined_call_operand.vmem [shape: f32[1,128], index: 3, kind: input, shape index: {}]
  %s4 = inlined_call_operand.vmem [shape: f32[8,32], index: 4, kind: input, shape index: {}, may-alias: {4,6}]
  %s5 = inlined_call_operand.vmem [shape: f32[8,32], index: 5, kind: input, shape index: {}, may-alias: {5,7}]
  %s6 = inlined_call_operand.vmem [shape: f32[8,32], index: 6, kind: output, shape index: {0}, may-alias: {4,6}]
  %s7 = inlined_call_operand.vmem [shape: f32[8,32], index: 7, kind: output, shape index: {1}, may-alias: {5,7}]
  %8 = xla_tuple %s6, %s7
  %s9 = sld [smem:[#allocation0]]
  $region69: #{decoder_rnn_forward.1} parent=0
    _
  %s11 = ssub.s32 1, %s9
  %s12 = scalar_select 0, %s11, %s9
  loop: start=0, step=1, limit=4
  $region2: #{decoder_rnn_forward.1} parent=0 // loop_pre_header
    _
  $region3: #{decoder_rnn_forward.1} parent=0 // loop_header
    %s14 = sphi 0, %s18
    %p15 = scmp.ge.s32.totalorder %s14, 4
    %s21 = sphi 0, %s33
    %s22 = sphi 0, %s29
    %s23 = sphi 0, %s21
    %s24 = sphi 0, %s22
    %s25 = sphi 0, %s23
    %s26 = sphi 0, %s24
    %s38 = sphi 0, %s40
    %s41 = sphi 0, %s38
    %s42 = sphi 0, %s41
    %s58 = sphi 0, %s42
    %s62 = sphi 0, %s62
    %s64 = sphi 0, %s62
    %s65 = sphi 0, %s64
    %s79 = sphi 0, %s65
    %s83 = sphi 0, %s83
    %s85 = sphi 0, %s83
    %s86 = sphi 0, %s85
    %s100 = sphi 0, %s86
    %s104 = sphi 0, %s104
    %s106 = sphi 0, %s104
    %s107 = sphi 0, %s106
    %s121 = sphi 0, %s107
    %s127 = sphi 0, %s129
    %s130 = sphi 0, %s127
    %s131 = sphi 0, %s130
    %s147 = sphi 0, %s131
    %s153 = sphi 0, %s155
    %s156 = sphi 0, %s153
    %s157 = sphi 0, %s156
    %s173 = sphi 0, %s157
    %s179 = sphi 0, %s181
    %s182 = sphi 0, %s179
    %s183 = sphi 0, %s182
    %s199 = sphi 0, %s183
    %s205 = sphi 0, %s207
    %s208 = sphi 0, %s205
    %s209 = sphi 0, %s208
    %s225 = sphi 0, %s209
  $region4: #{decoder_rnn_forward.1} parent=0 // loop_header_branch
    %17 = sbr.rel (%p15) target = $region8
  $region5: #{decoder_rnn_forward.1} parent=0 // loop_body
    %s19 = ssub.s32 %s14, 1
    %s20 = ssub.s32 %s14, 2
    %s27 = sadd.s32 1, %s22
    %p28 = scmp.ge.s32.totalorder %s27, 2
    %s29 = scalar_select %p28, 0, %s27
    %s30 = sadd.s32 1, %s21
    %s31 = scalar_select %p28, %s30, %s21
    %p32 = scmp.ge.s32.totalorder %s31, 1
    %s33 = scalar_select %p32, 0, %s31
    %s34 = ssub.s32 %s22, %s29
    %s35 = ssub.s32 %s21, %s33
    %s36 = sor.u32 %s34, %s35
    %p37 = scmp.eq.s32.totalorder %s36, 0
    %s39 = sadd.s32 %s38, 1
    %s40 = scalar_select %p37, %s38, %s39
    %p43 = pneg %p37
    %p44 = scmp.eq.s32.totalorder %s14, 1
    %p45 = por %p43, %p44
    %p46 = scmp.ne.s32.totalorder %s38, %s41
    %p47 = scmp.eq.s32.totalorder %s14, 0
    %p48 = por %p46, %p47
    %p49 = scmp.ne.s32.totalorder %s38, %s41
    %p50 = scmp.eq.s32.totalorder %s19, 1
    %p51 = por %p49, %p50
    %p52 = scmp.ne.s32.totalorder %s41, %s42
    %p53 = scmp.eq.s32.totalorder %s19, 0
    %p54 = por %p52, %p53
    %p55 = scmp.ne.s32.totalorder %s41, %s42
    %p56 = scmp.eq.s32.totalorder %s20, 1
    %p57 = por %p55, %p56
    %p59 = scmp.ne.s32.totalorder %s42, %s58
    %p60 = scmp.eq.s32.totalorder %s20, 0
    %p61 = por %p59, %p60
    %s63 = sadd.s32 %s62, 1
    %p66 = scmp.eq.s32.totalorder %s14, 1
    %p67 = scmp.ne.s32.totalorder %s62, %s64
    %p68 = scmp.eq.s32.totalorder %s14, 0
    %p69 = por %p67, %p68
    %p70 = scmp.ne.s32.totalorder %s62, %s64
    %p71 = scmp.eq.s32.totalorder %s19, 1
    %p72 = por %p70, %p71
    %p73 = scmp.ne.s32.totalorder %s64, %s65
    %p74 = scmp.eq.s32.totalorder %s19, 0
    %p75 = por %p73, %p74
    %p76 = scmp.ne.s32.totalorder %s64, %s65
    %p77 = scmp.eq.s32.totalorder %s20, 1
    %p78 = por %p76, %p77
    %p80 = scmp.ne.s32.totalorder %s65, %s79
    %p81 = scmp.eq.s32.totalorder %s20, 0
    %p82 = por %p80, %p81
    %s84 = sadd.s32 %s83, 1
    %p87 = scmp.eq.s32.totalorder %s14, 1
    %p88 = scmp.ne.s32.totalorder %s83, %s85
    %p89 = scmp.eq.s32.totalorder %s14, 0
    %p90 = por %p88, %p89
    %p91 = scmp.ne.s32.totalorder %s83, %s85
    %p92 = scmp.eq.s32.totalorder %s19, 1
    %p93 = por %p91, %p92
    %p94 = scmp.ne.s32.totalorder %s85, %s86
    %p95 = scmp.eq.s32.totalorder %s19, 0
    %p96 = por %p94, %p95
    %p97 = scmp.ne.s32.totalorder %s85, %s86
    %p98 = scmp.eq.s32.totalorder %s20, 1
    %p99 = por %p97, %p98
    %p101 = scmp.ne.s32.totalorder %s86, %s100
    %p102 = scmp.eq.s32.totalorder %s20, 0
    %p103 = por %p101, %p102
    %s105 = sadd.s32 %s104, 1
    %p108 = scmp.eq.s32.totalorder %s14, 1
    %p109 = scmp.ne.s32.totalorder %s104, %s106
    %p110 = scmp.eq.s32.totalorder %s14, 0
    %p111 = por %p109, %p110
    %p112 = scmp.ne.s32.totalorder %s104, %s106
    %p113 = scmp.eq.s32.totalorder %s19, 1
    %p114 = por %p112, %p113
    %p115 = scmp.ne.s32.totalorder %s106, %s107
    %p116 = scmp.eq.s32.totalorder %s19, 0
    %p117 = por %p115, %p116
    %p118 = scmp.ne.s32.totalorder %s106, %s107
    %p119 = scmp.eq.s32.totalorder %s20, 1
    %p120 = por %p118, %p119
    %p122 = scmp.ne.s32.totalorder %s107, %s121
    %p123 = scmp.eq.s32.totalorder %s20, 0
    %p124 = por %p122, %p123
    %s125 = ssub.s32 %s21, %s33
    %p126 = scmp.eq.s32.totalorder %s125, 0
    %s128 = sadd.s32 %s127, 1
    %s129 = scalar_select %p126, %s127, %s128
    %p132 = pneg %p126
    %p133 = scmp.eq.s32.totalorder %s14, 1
    %p134 = por %p132, %p133
    %p135 = scmp.ne.s32.totalorder %s127, %s130
    %p136 = scmp.eq.s32.totalorder %s14, 0
    %p137 = por %p135, %p136
    %p138 = scmp.ne.s32.totalorder %s127, %s130
    %p139 = scmp.eq.s32.totalorder %s19, 1
    %p140 = por %p138, %p139
    %p141 = scmp.ne.s32.totalorder %s130, %s131
    %p142 = scmp.eq.s32.totalorder %s19, 0
    %p143 = por %p141, %p142
    %p144 = scmp.ne.s32.totalorder %s130, %s131
    %p145 = scmp.eq.s32.totalorder %s20, 1
    %p146 = por %p144, %p145
    %p148 = scmp.ne.s32.totalorder %s131, %s147
    %p149 = scmp.eq.s32.totalorder %s20, 0
    %p150 = por %p148, %p149
    %s151 = ssub.s32 %s21, %s33
    %p152 = scmp.eq.s32.totalorder %s151, 0
    %s154 = sadd.s32 %s153, 1
    %s155 = scalar_select %p152, %s153, %s154
    %p158 = pneg %p152
    %p159 = scmp.eq.s32.totalorder %s14, 1
    %p160 = por %p158, %p159
    %p161 = scmp.ne.s32.totalorder %s153, %s156
    %p162 = scmp.eq.s32.totalorder %s14, 0
    %p163 = por %p161, %p162
    %p164 = scmp.ne.s32.totalorder %s153, %s156
    %p165 = scmp.eq.s32.totalorder %s19, 1
    %p166 = por %p164, %p165
    %p167 = scmp.ne.s32.totalorder %s156, %s157
    %p168 = scmp.eq.s32.totalorder %s19, 0
    %p169 = por %p167, %p168
    %p170 = scmp.ne.s32.totalorder %s156, %s157
    %p171 = scmp.eq.s32.totalorder %s20, 1
    %p172 = por %p170, %p171
    %p174 = scmp.ne.s32.totalorder %s157, %s173
    %p175 = scmp.eq.s32.totalorder %s20, 0
    %p176 = por %p174, %p175
    %s177 = ssub.s32 %s21, %s33
    %p178 = scmp.eq.s32.totalorder %s177, 0
    %s180 = sadd.s32 %s179, 1
    %s181 = scalar_select %p178, %s179, %s180
    %p184 = pneg %p178
    %p185 = scmp.eq.s32.totalorder %s14, 1
    %p186 = por %p184, %p185
    %p187 = scmp.ne.s32.totalorder %s179, %s182
    %p188 = scmp.eq.s32.totalorder %s14, 0
    %p189 = por %p187, %p188
    %p190 = scmp.ne.s32.totalorder %s179, %s182
    %p191 = scmp.eq.s32.totalorder %s19, 1
    %p192 = por %p190, %p191
    %p193 = scmp.ne.s32.totalorder %s182, %s183
    %p194 = scmp.eq.s32.totalorder %s19, 0
    %p195 = por %p193, %p194
    %p196 = scmp.ne.s32.totalorder %s182, %s183
    %p197 = scmp.eq.s32.totalorder %s20, 1
    %p198 = por %p196, %p197
    %p200 = scmp.ne.s32.totalorder %s183, %s199
    %p201 = scmp.eq.s32.totalorder %s20, 0
    %p202 = por %p200, %p201
    %s203 = ssub.s32 %s21, %s33
    %p204 = scmp.eq.s32.totalorder %s203, 0
    %s206 = sadd.s32 %s205, 1
    %s207 = scalar_select %p204, %s205, %s206
    %p210 = pneg %p204
    %p211 = scmp.eq.s32.totalorder %s14, 1
    %p212 = por %p210, %p211
    %p213 = scmp.ne.s32.totalorder %s205, %s208
    %p214 = scmp.eq.s32.totalorder %s14, 0
    %p215 = por %p213, %p214
    %p216 = scmp.ne.s32.totalorder %s205, %s208
    %p217 = scmp.eq.s32.totalorder %s19, 1
    %p218 = por %p216, %p217
    %p219 = scmp.ne.s32.totalorder %s208, %s209
    %p220 = scmp.eq.s32.totalorder %s19, 0
    %p221 = por %p219, %p220
    %p222 = scmp.ne.s32.totalorder %s208, %s209
    %p223 = scmp.eq.s32.totalorder %s20, 1
    %p224 = por %p222, %p223
    %p226 = scmp.ne.s32.totalorder %s209, %s225
    %p227 = scmp.eq.s32.totalorder %s20, 0
    %p228 = por %p226, %p227
    %p229 = scmp.le.s32.totalorder 1, %s14
    %p230 = scmp.lt.s32.totalorder %s14, 3
    %p231 = pnand %p229, %p230
    %p232 = pneg %p231
    // Predicated region
    $region9: #{decoder_rnn_forward.1} parent=5 // pred_check
      _
    $region10: #{decoder_rnn_forward.1} parent=5 // pred_check_branch
      %234 = sbr.rel (%p231) target = $region12
    $region11: #{decoder_rnn_forward.1} parent=5 // pred_region
      %s235 = ssub.s32 %s14, 1
      // Predicated region
      $region13: #{decoder_rnn_forward.1} parent=11 // pred_check
        %p236 = pneg %p75
      $region14: #{decoder_rnn_forward.1} parent=11 // pred_check_branch
        %238 = sbr.rel (%p236) target = $region16
      $region15: #{decoder_rnn_forward.1} parent=11 // pred_region
        _
      $region16: #{decoder_rnn_forward.1} parent=11 // pred_fallthru
        _
      // Predicated region
      $region17: #{decoder_rnn_forward.1} parent=11 // pred_check
        %p239 = pneg %p96
      $region18: #{decoder_rnn_forward.1} parent=11 // pred_check_branch
        %241 = sbr.rel (%p239) target = $region20
      $region19: #{decoder_rnn_forward.1} parent=11 // pred_region
        _
      $region20: #{decoder_rnn_forward.1} parent=11 // pred_fallthru
        _
      // Predicated region
      $region21: #{decoder_rnn_forward.1} parent=11 // pred_check
        %p242 = pneg %p117
      $region22: #{decoder_rnn_forward.1} parent=11 // pred_check_branch
        %244 = sbr.rel (%p242) target = $region24
      $region23: #{decoder_rnn_forward.1} parent=11 // pred_region
        _
      $region24: #{decoder_rnn_forward.1} parent=11 // pred_fallthru
        _
      // Predicated region
      $region25: #{decoder_rnn_forward.1} parent=11 // pred_check
        %p245 = pneg %p143
      $region26: #{decoder_rnn_forward.1} parent=11 // pred_check_branch
        %247 = sbr.rel (%p245) target = $region28
      $region27: #{decoder_rnn_forward.1} parent=11 // pred_region
        %p248 = scmp.lt.s32.totalorder %s23, 0
        %s249 = scalar_select %p248, %s23, 0
        %s250 = smul.addr %s249, 8
        %s251 = scalar_lea.vmem %s4, %s250
      $region28: #{decoder_rnn_forward.1} parent=11 // pred_fallthru
        _
      // Predicated region
      $region29: #{decoder_rnn_forward.1} parent=11 // pred_check
        %p252 = pneg %p169
      $region30: #{decoder_rnn_forward.1} parent=11 // pred_check_branch
        %254 = sbr.rel (%p252) target = $region32
      $region31: #{decoder_rnn_forward.1} parent=11 // pred_region
        %p255 = scmp.lt.s32.totalorder %s23, 0
        %s256 = scalar_select %p255, %s23, 0
        %s257 = smul.addr %s256, 8
        %s258 = scalar_lea.vmem %s5, %s257
      $region32: #{decoder_rnn_forward.1} parent=11 // pred_fallthru
        _
    $region12: #{decoder_rnn_forward.1} parent=5 // pred_fallthru
      _
    %p259 = scmp.lt.s32.totalorder %s14, 2
    // Predicated region
    $region33: #{decoder_rnn_forward.1} parent=5 // pred_check
      %p260 = pneg %p259
    $region34: #{decoder_rnn_forward.1} parent=5 // pred_check_branch
      %262 = sbr.rel (%p260) target = $region36
    $region35: #{decoder_rnn_forward.1} parent=5 // pred_region
      // Predicated region
      $region37: #{decoder_rnn_forward.1} parent=35 // pred_check
        %p263 = pneg %p48
      $region38: #{decoder_rnn_forward.1} parent=35 // pred_check_branch
        %265 = sbr.rel (%p263) target = $region40
      $region39: #{decoder_rnn_forward.1} parent=35 // pred_region
        %s266 = smul.u32 4, %s22
        %p267 = scmp.lt.s32.totalorder %s266, 7
        %s268 = scalar_select %p267, %s266, 7
        %p269 = scmp.lt.s32.totalorder %s21, 0
        %s270 = scalar_select %p269, %s21, 0
        %s271 = sadd.s32 %s270, %s268
        %s272 = smul.addr %s271, 8
        %s273 = scalar_lea.vmem %s0, %s272
        %s274 = smul.u32 4, %s22
      $region40: #{decoder_rnn_forward.1} parent=35 // pred_fallthru
        _
    $region36: #{decoder_rnn_forward.1} parent=5 // pred_fallthru
      _
    %p275 = scmp.le.s32.totalorder 1, %s14
    %p276 = scmp.lt.s32.totalorder %s14, 3
    %p277 = pnand %p275, %p276
    %p278 = pneg %p277
    // Predicated region
    $region41: #{decoder_rnn_forward.1} parent=5 // pred_check
      _
    $region42: #{decoder_rnn_forward.1} parent=5 // pred_check_branch
      %280 = sbr.rel (%p277) target = $region44
    $region43: #{decoder_rnn_forward.1} parent=5 // pred_region
      %s281 = ssub.s32 %s14, 1
      %s282 = smul.u32 4, %s24
      %p283 = scmp.lt.s32.totalorder %s282, 7
      %s284 = scalar_select %p283, %s282, 7
      %p285 = scmp.lt.s32.totalorder %s23, 0
      %s286 = scalar_select %p285, %s23, 0
      %s287 = sadd.s32 %s286, %s284
      %s288 = smul.addr %s287, 8
      %s289 = scalar_lea.vmem %s0, %s288
      %p290 = pneg %p54
      %p291 = pneg %p51
      %p292 = pneg %p75
      %p293 = pneg %p72
      %p294 = pneg %p96
      %p295 = pneg %p93
      %p296 = pneg %p117
      %p297 = pneg %p114
      %p298 = scmp.lt.s32.totalorder %s23, 0
      %s299 = scalar_select %p298, %s23, 0
      %s300 = smul.addr %s299, 8
      %s301 = scalar_lea.vmem %s4, %s300
      %p302 = pneg %p143
      %p303 = pneg %p140
      %p304 = scmp.lt.s32.totalorder %s23, 0
      %s305 = scalar_select %p304, %s23, 0
      %s306 = smul.addr %s305, 8
      %s307 = scalar_lea.vmem %s5, %s306
      %p308 = pneg %p169
      %p309 = pneg %p166
      %p310 = pneg %p195
      %p311 = pneg %p192
      %p312 = scmp.lt.s32.totalorder %s23, 0
      %s313 = scalar_select %p312, %s23, 0
      %s314 = smul.addr %s313, 8
      %s315 = scalar_lea.vmem %s6, %s314
      %p316 = pneg %p221
      %p317 = pneg %p218
      %p318 = scmp.lt.s32.totalorder %s23, 0
      %s319 = scalar_select %p318, %s23, 0
      %s320 = smul.addr %s319, 8
      %s321 = scalar_lea.vmem %s7, %s320
      %s322 = smul.u32 4, %s24
      %p323 = scmp.lt.s32.totalorder %s322, 7
      %s324 = scalar_select %p323, %s322, 7
      %p325 = scmp.lt.s32.totalorder %s23, 0
      %s326 = scalar_select %p325, %s23, 0
      %s327 = sadd.s32 %s326, %s324
      %s328 = smul.addr %s327, 8
      %s329 = scalar_lea.vmem %s0, %s328
      %s330 = smul.u32 4, %s24
      %p331 = scmp.lt.s32.totalorder %s23, 0
      %s332 = scalar_select %p331, %s23, 0
      %s333 = smul.addr %s332, 8
      %s334 = scalar_lea.vmem %s4, %s333
      %p335 = scmp.lt.s32.totalorder %s23, 0
      %s336 = scalar_select %p335, %s23, 0
      %s337 = smul.addr %s336, 8
      %s338 = scalar_lea.vmem %s5, %s337
      %p339 = scmp.lt.s32.totalorder %s23, 0
      %s340 = scalar_select %p339, %s23, 0
      %s341 = smul.addr %s340, 8
      %s342 = scalar_lea.vmem %s6, %s341
      %p343 = scmp.lt.s32.totalorder %s23, 0
      %s344 = scalar_select %p343, %s23, 0
      %s345 = smul.addr %s344, 8
      %s346 = scalar_lea.vmem %s7, %s345
      %p347 = scmp.eq.s32.totalorder %s24, 0
      // Predicated region
      $region45: #{decoder_rnn_forward.1} parent=43 // pred_check
        %p348 = pneg %p347
      $region46: #{decoder_rnn_forward.1} parent=43 // pred_check_branch
        %350 = sbr.rel (%p348) target = $region48
      $region47: #{decoder_rnn_forward.1} parent=43 // pred_region
        %v351 = vld [vmem:[%s334] sm:$0xff]
        %vm352 = vcmask 261120
        %353 = vst.msk [vmem:[#allocation3] sm:$0xff] %vm352, %v351
        %v354 = vld [vmem:[%s338] sm:$0xff]
        %355 = vst.msk [vmem:[#allocation4] sm:$0xff] %vm352, %v354
      $region48: #{decoder_rnn_forward.1} parent=43 // pred_fallthru
        _
      %v356 = vld [vmem:[%s329] sm:$0xff]
      %v357 = vld [vmem:[%s329 + $0x8] sm:$0xff]
      %v358 = vld [vmem:[%s329 + $0x10] sm:$0xff]
      %v359 = vld [vmem:[%s329 + $0x18] sm:$0xff]
      %v360 = vld [vmem:[%s1] sm:$0xff]
      %v361 = vld [vmem:[%s1 + $0x8] sm:$0xff]
      %v362 = vld [vmem:[%s1 + $0x10] sm:$0xff]
      %v363 = vld [vmem:[%s1 + $0x18] sm:$0xff]
      %v364 = vld [vmem:[%s1 + $0x20] sm:$0xff]
      %v365 = vld [vmem:[%s1 + $0x28] sm:$0x3]
      %v366 = vld [vmem:[%s3] sm:$0x1]
      %v368 = vlaneseq
      %v369 = vshrl.u32 %v368, 7
      %v370 = vsub.s32 0, %v369
      %v371 = vrot.slane %v366, %v370
      %vm373 = vcmask 343040
      %v375 = vsel %vm373, %v356, 0
      %v378 = vsel %vm373, %v357, 0
      %v381 = vsel %vm373, %v358, 0
      %v384 = vsel %vm373, %v359, 0
      %vm386 = vcmask 1041408
      %v388 = vsel %vm386, %v365, 0
      %390 = vmatprep.subr.mxu0 0.0
      %391 = vmatpush1.msra.mxu0 %v360
      %392 = vmatprep.subr.mxu0 0.0
      %393 = vmatpush1.msra.mxu0 %v361
      %394 = vmatprep.subr.mxu0 0.0
      %395 = vmatpush1.msra.mxu0 %v362
      %396 = vmatprep.subr.mxu0 0.0
      %397 = vmatpush1.msra.mxu0 %v363
      %398 = vmatprep.subr.mxu0 0.0
      %399 = vmatpush1.msra.mxu0 %v364
      %400 = vmatprep.subr.mxu0 0.0
      %401 = vmatpush1.msra.mxu0 %v388
      %402 = vmatprep.subr.mxu0 0.0
      %403 = vmatpush1.msra.mxu0 0.0
      %404 = vmatprep.subr.mxu0 0.0
      %405 = vmatpush1.msra.mxu0 0.0
      %406 = vmatprep.subr.mxu0 0.0
      %407 = vmatpush1.msra.mxu0 0.0
      %408 = vmatprep.subr.mxu0 0.0
      %409 = vmatpush1.msra.mxu0 0.0
      %410 = vmatprep.subr.mxu0 0.0
      %411 = vmatpush1.msra.mxu0 0.0
      %412 = vmatprep.subr.mxu0 0.0
      %413 = vmatpush1.msra.mxu0 0.0
      %414 = vmatprep.subr.mxu0 0.0
      %415 = vmatpush1.msra.mxu0 0.0
      %416 = vmatprep.subr.mxu0 0.0
      %417 = vmatpush1.msra.mxu0 0.0
      %418 = vmatprep.subr.mxu0 0.0
      %419 = vmatpush1.msra.mxu0 0.0
      %420 = vmatprep.subr.mxu0 0.0
      %421 = vmatpush1.msra.mxu0 0.0
      %422 = vmatprep.subr.mxu0 0.0
      %423 = vmatpush1.msra.mxu0 0.0
      %424 = vmatprep.subr.mxu0 0.0
      %425 = vmatpush1.msra.mxu0 0.0
      %426 = vmatprep.subr.mxu0 0.0
      %427 = vmatpush1.msra.mxu0 0.0
      %428 = vmatprep.subr.mxu0 0.0
      %429 = vmatpush1.msra.mxu0 0.0
      %430 = vmatprep.subr.mxu0 0.0
      %431 = vmatpush1.msra.mxu0 0.0
      %432 = vmatprep.subr.mxu0 0.0
      %433 = vmatpush1.msra.mxu0 0.0
      %434 = vmatprep.subr.mxu0 0.0
      %435 = vmatpush1.msra.mxu0 0.0
      %436 = vmatprep.subr.mxu0 0.0
      %437 = vmatpush1.msra.mxu0 0.0
      %438 = vmatprep.subr.mxu0 0.0
      %439 = vmatpush1.msra.mxu0 0.0
      %440 = vmatprep.subr.mxu0 0.0
      %441 = vmatpush1.msra.mxu0 0.0
      %442 = vmatprep.subr.mxu0 0.0
      %443 = vmatpush1.msra.mxu0 0.0
      %444 = vmatprep.subr.mxu0 0.0
      %445 = vmatpush1.msra.mxu0 0.0
      %446 = vmatprep.subr.mxu0 0.0
      %447 = vmatpush1.msra.mxu0 0.0
      %448 = vmatprep.subr.mxu0 0.0
      %449 = vmatpush1.msra.mxu0 0.0
      %450 = vmatprep.subr.mxu0 0.0
      %451 = vmatpush1.msra.mxu0 0.0
      %452 = vmatprep.subr.mxu0 0.0
      %453 = vmatpush1.msra.mxu0 0.0
      %454 = vmatprep.mubr.f32.mxu0 0.0
      %455 = vmatmul.mubr.f32.gmra.mrb[0].mxu0 %v375
      %v456 = vpop.f32.mrb[0].mxu0
      %v457 = vadd.f32 %v371, %v456
      %v458 = vpop.f32.mrb[0].mxu0
      %459 = vmatprep.mubr.f32.mxu0 0.0
      %460 = vmatmul.mubr.f32.gmra.mrb[0].mxu0 %v378
      %v461 = vpop.f32.mrb[0].mxu0
      %v462 = vadd.f32 %v371, %v461
      %v463 = vpop.f32.mrb[0].mxu0
      %464 = vmatprep.mubr.f32.mxu0 0.0
      %465 = vmatmul.mubr.f32.gmra.mrb[0].mxu0 %v381
      %v466 = vpop.f32.mrb[0].mxu0
      %v467 = vadd.f32 %v371, %v466
      %v468 = vpop.f32.mrb[0].mxu0
      %469 = vmatprep.mubr.f32.mxu0 0.0
      %470 = vmatmul.mubr.f32.gmra.mrb[0].mxu0 %v384
      %v471 = vpop.f32.mrb[0].mxu0
      %v472 = vadd.f32 %v371, %v471
      %v473 = vpop.f32.mrb[0].mxu0
      %474 = vdwg.mxu0
      %475 = vst [vmem:[#allocation2] sm:$0xff] %v457
      %476 = vst [vmem:[#allocation2 + $0x8] sm:$0xff] %v462
      %477 = vst [vmem:[#allocation2 + $0x10] sm:$0xff] %v467
      %478 = vst [vmem:[#allocation2 + $0x18] sm:$0xff] %v472
      %v479 = vld [vmem:[%s2] sm:$0xff]
      %v480 = vld [vmem:[%s2 + $0x8] sm:$0xff]
      %v481 = vld [vmem:[%s2 + $0x10] sm:$0xff]
      %v482 = vld [vmem:[%s2 + $0x18] sm:$0xff]
      %v483 = vld [vmem:[#allocation3] sm:$0xff]
      %v484 = vld [vmem:[#allocation4] sm:$0xff]
      %v485 = vld [vmem:[#allocation2] sm:$0xff]
      %vm486 = vcmask 261120
      %v488 = vsel %vm486, %v483, 0
      %490 = vmatprep.subr.mxu0 0.0
      %491 = vmatpush1.msra.mxu0 %v479
      %492 = vmatprep.subr.mxu0 0.0
      %493 = vmatpush1.msra.mxu0 %v480
      %494 = vmatprep.subr.mxu0 0.0
      %495 = vmatpush1.msra.mxu0 %v481
      %496 = vmatprep.subr.mxu0 0.0
      %497 = vmatpush1.msra.mxu0 %v482
      %498 = vmatprep.subr.mxu0 0.0
      %499 = vmatpush1.msra.mxu0 0.0
      %500 = vmatprep.subr.mxu0 0.0
      %501 = vmatpush1.msra.mxu0 0.0
      %502 = vmatprep.subr.mxu0 0.0
      %503 = vmatpush1.msra.mxu0 0.0
      %504 = vmatprep.subr.mxu0 0.0
      %505 = vmatpush1.msra.mxu0 0.0
      %506 = vmatprep.subr.mxu0 0.0
      %507 = vmatpush1.msra.mxu0 0.0
      %508 = vmatprep.subr.mxu0 0.0
      %509 = vmatpush1.msra.mxu0 0.0
      %510 = vmatprep.subr.mxu0 0.0
      %511 = vmatpush1.msra.mxu0 0.0
      %512 = vmatprep.subr.mxu0 0.0
      %513 = vmatpush1.msra.mxu0 0.0
      %514 = vmatprep.subr.mxu0 0.0
      %515 = vmatpush1.msra.mxu0 0.0
      %516 = vmatprep.subr.mxu0 0.0
      %517 = vmatpush1.msra.mxu0 0.0
      %518 = vmatprep.subr.mxu0 0.0
      %519 = vmatpush1.msra.mxu0 0.0
      %520 = vmatprep.subr.mxu0 0.0
      %521 = vmatpush1.msra.mxu0 0.0
      %522 = vmatprep.subr.mxu0 0.0
      %523 = vmatpush1.msra.mxu0 0.0
      %524 = vmatprep.subr.mxu0 0.0
      %525 = vmatpush1.msra.mxu0 0.0
      %526 = vmatprep.subr.mxu0 0.0
      %527 = vmatpush1.msra.mxu0 0.0
      %528 = vmatprep.subr.mxu0 0.0
      %529 = vmatpush1.msra.mxu0 0.0
      %530 = vmatprep.subr.mxu0 0.0
      %531 = vmatpush1.msra.mxu0 0.0
      %532 = vmatprep.subr.mxu0 0.0
      %533 = vmatpush1.msra.mxu0 0.0
      %534 = vmatprep.subr.mxu0 0.0
      %535 = vmatpush1.msra.mxu0 0.0
      %536 = vmatprep.subr.mxu0 0.0
      %537 = vmatpush1.msra.mxu0 0.0
      %538 = vmatprep.subr.mxu0 0.0
      %539 = vmatpush1.msra.mxu0 0.0
      %540 = vmatprep.subr.mxu0 0.0
      %541 = vmatpush1.msra.mxu0 0.0
      %542 = vmatprep.subr.mxu0 0.0
      %543 = vmatpush1.msra.mxu0 0.0
      %544 = vmatprep.subr.mxu0 0.0
      %545 = vmatpush1.msra.mxu0 0.0
      %546 = vmatprep.subr.mxu0 0.0
      %547 = vmatpush1.msra.mxu0 0.0
      %548 = vmatprep.subr.mxu0 0.0
      %549 = vmatpush1.msra.mxu0 0.0
      %550 = vmatprep.subr.mxu0 0.0
      %551 = vmatpush1.msra.mxu0 0.0
      %552 = vmatprep.subr.mxu0 0.0
      %553 = vmatpush1.msra.mxu0 0.0
      %554 = vmatprep.mubr.f32.mxu0 0.0
      %555 = vmatmul.mubr.f32.gmra.mrb[0].mxu0 %v488
      %v556 = vpop.f32.mrb[0].mxu0
      %v557 = vadd.f32 0.0, %v556
      %v558 = vpop.f32.mrb[0].mxu0
      %559 = vdwg.mxu0
      %v560 = vadd.f32 %v485, %v557
      %v561 = vmul.f32 %v560, 0.5
      %v562 = vtanh.pop %v561
      %v563 = vadd.f32 %v562, 1.0
      %v564 = vmul.f32 %v563, 0.5
      %v565 = vtanh.pop %v560
      %567 = vrot.lane.b32.xlu0 %v484, 32
      %v568 = vpop.permute.xlu0 %567
      %v570 = vmul.f32 %v564, %v568
      %572 = vrot.lane.b32.xlu0 %v565, 64
      %v573 = vpop.permute.xlu0 %572
      %v575 = vmul.f32 %v564, %v573
      %577 = vrot.lane.b32.xlu0 %v575, 32
      %v578 = vpop.permute.xlu0 %577
      %v580 = vadd.f32 %v570, %v578
      %v581 = vtanh.pop %v580
      %583 = vrot.lane.b32.xlu0 %v581, 64
      %v584 = vpop.permute.xlu0 %583
      %v586 = vmul.f32 %v564, %v584
      %s587 = scalar_lea.vmem [#allocation2], 8
      %v588 = vld [vmem:[%s587] sm:$0xff]
      %590 = vrot.lane.b32.xlu0 %v586, 32
      %v591 = vpop.permute.xlu0 %590
      %v592 = vsel %vm486, %v591, 0
      %594 = vmatprep.subr.mxu0 0.0
      %595 = vmatpush1.msra.mxu0 %v479
      %596 = vmatprep.subr.mxu0 0.0
      %597 = vmatpush1.msra.mxu0 %v480
      %598 = vmatprep.subr.mxu0 0.0
      %599 = vmatpush1.msra.mxu0 %v481
      %600 = vmatprep.subr.mxu0 0.0
      %601 = vmatpush1.msra.mxu0 %v482
      %602 = vmatprep.subr.mxu0 0.0
      %603 = vmatpush1.msra.mxu0 0.0
      %604 = vmatprep.subr.mxu0 0.0
      %605 = vmatpush1.msra.mxu0 0.0
      %606 = vmatprep.subr.mxu0 0.0
      %607 = vmatpush1.msra.mxu0 0.0
      %608 = vmatprep.subr.mxu0 0.0
      %609 = vmatpush1.msra.mxu0 0.0
      %610 = vmatprep.subr.mxu0 0.0
      %611 = vmatpush1.msra.mxu0 0.0
      %612 = vmatprep.subr.mxu0 0.0
      %613 = vmatpush1.msra.mxu0 0.0
      %614 = vmatprep.subr.mxu0 0.0
      %615 = vmatpush1.msra.mxu0 0.0
      %616 = vmatprep.subr.mxu0 0.0
      %617 = vmatpush1.msra.mxu0 0.0
      %618 = vmatprep.subr.mxu0 0.0
      %619 = vmatpush1.msra.mxu0 0.0
      %620 = vmatprep.subr.mxu0 0.0
      %621 = vmatpush1.msra.mxu0 0.0
      %622 = vmatprep.subr.mxu0 0.0
      %623 = vmatpush1.msra.mxu0 0.0
      %624 = vmatprep.subr.mxu0 0.0
      %625 = vmatpush1.msra.mxu0 0.0
      %626 = vmatprep.subr.mxu0 0.0
      %627 = vmatpush1.msra.mxu0 0.0
      %628 = vmatprep.subr.mxu0 0.0
      %629 = vmatpush1.msra.mxu0 0.0
      %630 = vmatprep.subr.mxu0 0.0
      %631 = vmatpush1.msra.mxu0 0.0
      %632 = vmatprep.subr.mxu0 0.0
      %633 = vmatpush1.msra.mxu0 0.0
      %634 = vmatprep.subr.mxu0 0.0
      %635 = vmatpush1.msra.mxu0 0.0
      %636 = vmatprep.subr.mxu0 0.0
      %637 = vmatpush1.msra.mxu0 0.0
      %638 = vmatprep.subr.mxu0 0.0
      %639 = vmatpush1.msra.mxu0 0.0
      %640 = vmatprep.subr.mxu0 0.0
      %641 = vmatpush1.msra.mxu0 0.0
      %642 = vmatprep.subr.mxu0 0.0
      %643 = vmatpush1.msra.mxu0 0.0
      %644 = vmatprep.subr.mxu0 0.0
      %645 = vmatpush1.msra.mxu0 0.0
      %646 = vmatprep.subr.mxu0 0.0
      %647 = vmatpush1.msra.mxu0 0.0
      %648 = vmatprep.subr.mxu0 0.0
      %649 = vmatpush1.msra.mxu0 0.0
      %650 = vmatprep.subr.mxu0 0.0
      %651 = vmatpush1.msra.mxu0 0.0
      %652 = vmatprep.subr.mxu0 0.0
      %653 = vmatpush1.msra.mxu0 0.0
      %654 = vmatprep.subr.mxu0 0.0
      %655 = vmatpush1.msra.mxu0 0.0
      %656 = vmatprep.subr.mxu0 0.0
      %657 = vmatpush1.msra.mxu0 0.0
      %658 = vmatprep.mubr.f32.mxu0 0.0
      %659 = vmatmul.mubr.f32.gmra.mrb[0].mxu0 %v592
      %v660 = vpop.f32.mrb[0].mxu0
      %v661 = vadd.f32 0.0, %v660
      %v662 = vpop.f32.mrb[0].mxu0
      %663 = vdwg.mxu0
      %v664 = vadd.f32 %v588, %v661
      %v665 = vmul.f32 %v664, 0.5
      %v666 = vtanh.pop %v665
      %v667 = vadd.f32 %v666, 1.0
      %v668 = vmul.f32 %v667, 0.5
      %v669 = vtanh.pop %v664
      %v670 = vmul.f32 %v668, %v580
      %672 = vrot.lane.b32.xlu0 %v669, 64
      %v673 = vpop.permute.xlu0 %672
      %v675 = vmul.f32 %v668, %v673
      %677 = vrot.lane.b32.xlu0 %v675, 32
      %v678 = vpop.permute.xlu0 %677
      %v680 = vadd.f32 %v670, %v678
      %v681 = vtanh.pop %v680
      %683 = vrot.lane.b32.xlu0 %v681, 64
      %v684 = vpop.permute.xlu0 %683
      %v686 = vmul.f32 %v668, %v684
      %s687 = scalar_lea.vmem [#allocation2], 16
      %v688 = vld [vmem:[%s687] sm:$0xff]
      %690 = vrot.lane.b32.xlu0 %v686, 32
      %v691 = vpop.permute.xlu0 %690
      %v692 = vsel %vm486, %v691, 0
      %694 = vmatprep.subr.mxu0 0.0
      %695 = vmatpush1.msra.mxu0 %v479
      %696 = vmatprep.subr.mxu0 0.0
      %697 = vmatpush1.msra.mxu0 %v480
      %698 = vmatprep.subr.mxu0 0.0
      %699 = vmatpush1.msra.mxu0 %v481
      %700 = vmatprep.subr.mxu0 0.0
      %701 = vmatpush1.msra.mxu0 %v482
      %702 = vmatprep.subr.mxu0 0.0
      %703 = vmatpush1.msra.mxu0 0.0
      %704 = vmatprep.subr.mxu0 0.0
      %705 = vmatpush1.msra.mxu0 0.0
      %706 = vmatprep.subr.mxu0 0.0
      %707 = vmatpush1.msra.mxu0 0.0
      %708 = vmatprep.subr.mxu0 0.0
      %709 = vmatpush1.msra.mxu0 0.0
      %710 = vmatprep.subr.mxu0 0.0
      %711 = vmatpush1.msra.mxu0 0.0
      %712 = vmatprep.subr.mxu0 0.0
      %713 = vmatpush1.msra.mxu0 0.0
      %714 = vmatprep.subr.mxu0 0.0
      %715 = vmatpush1.msra.mxu0 0.0
      %716 = vmatprep.subr.mxu0 0.0
      %717 = vmatpush1.msra.mxu0 0.0
      %718 = vmatprep.subr.mxu0 0.0
      %719 = vmatpush1.msra.mxu0 0.0
      %720 = vmatprep.subr.mxu0 0.0
      %721 = vmatpush1.msra.mxu0 0.0
      %722 = vmatprep.subr.mxu0 0.0
      %723 = vmatpush1.msra.mxu0 0.0
      %724 = vmatprep.subr.mxu0 0.0
      %725 = vmatpush1.msra.mxu0 0.0
      %726 = vmatprep.subr.mxu0 0.0
      %727 = vmatpush1.msra.mxu0 0.0
      %728 = vmatprep.subr.mxu0 0.0
      %729 = vmatpush1.msra.mxu0 0.0
      %730 = vmatprep.subr.mxu0 0.0
      %731 = vmatpush1.msra.mxu0 0.0
      %732 = vmatprep.subr.mxu0 0.0
      %733 = vmatpush1.msra.mxu0 0.0
      %734 = vmatprep.subr.mxu0 0.0
      %735 = vmatpush1.msra.mxu0 0.0
      %736 = vmatprep.subr.mxu0 0.0
      %737 = vmatpush1.msra.mxu0 0.0
      %738 = vmatprep.subr.mxu0 0.0
      %739 = vmatpush1.msra.mxu0 0.0
      %740 = vmatprep.subr.mxu0 0.0
      %741 = vmatpush1.msra.mxu0 0.0
      %742 = vmatprep.subr.mxu0 0.0
      %743 = vmatpush1.msra.mxu0 0.0
      %744 = vmatprep.subr.mxu0 0.0
      %745 = vmatpush1.msra.mxu0 0.0
      %746 = vmatprep.subr.mxu0 0.0
      %747 = vmatpush1.msra.mxu0 0.0
      %748 = vmatprep.subr.mxu0 0.0
      %749 = vmatpush1.msra.mxu0 0.0
      %750 = vmatprep.subr.mxu0 0.0
      %751 = vmatpush1.msra.mxu0 0.0
      %752 = vmatprep.subr.mxu0 0.0
      %753 = vmatpush1.msra.mxu0 0.0
      %754 = vmatprep.subr.mxu0 0.0
      %755 = vmatpush1.msra.mxu0 0.0
      %756 = vmatprep.subr.mxu0 0.0
      %757 = vmatpush1.msra.mxu0 0.0
      %758 = vmatprep.mubr.f32.mxu0 0.0
      %759 = vmatmul.mubr.f32.gmra.mrb[0].mxu0 %v692
      %v760 = vpop.f32.mrb[0].mxu0
      %v761 = vadd.f32 0.0, %v760
      %v762 = vpop.f32.mrb[0].mxu0
      %763 = vdwg.mxu0
      %v764 = vadd.f32 %v688, %v761
      %v765 = vmul.f32 %v764, 0.5
      %v766 = vtanh.pop %v765
      %v767 = vadd.f32 %v766, 1.0
      %v768 = vmul.f32 %v767, 0.5
      %v769 = vtanh.pop %v764
      %v770 = vmul.f32 %v768, %v680
      %772 = vrot.lane.b32.xlu0 %v769, 64
      %v773 = vpop.permute.xlu0 %772
      %v775 = vmul.f32 %v768, %v773
      %777 = vrot.lane.b32.xlu0 %v775, 32
      %v778 = vpop.permute.xlu0 %777
      %v780 = vadd.f32 %v770, %v778
      %v781 = vtanh.pop %v780
      %783 = vrot.lane.b32.xlu0 %v781, 64
      %v784 = vpop.permute.xlu0 %783
      %v786 = vmul.f32 %v768, %v784
      %s787 = scalar_lea.vmem [#allocation2], 24
      %v788 = vld [vmem:[%s787] sm:$0xff]
      %790 = vrot.lane.b32.xlu0 %v786, 32
      %v791 = vpop.permute.xlu0 %790
      %v792 = vsel %vm486, %v791, 0
      %794 = vmatprep.subr.mxu0 0.0
      %795 = vmatpush1.msra.mxu0 %v479
      %796 = vmatprep.subr.mxu0 0.0
      %797 = vmatpush1.msra.mxu0 %v480
      %798 = vmatprep.subr.mxu0 0.0
      %799 = vmatpush1.msra.mxu0 %v481
      %800 = vmatprep.subr.mxu0 0.0
      %801 = vmatpush1.msra.mxu0 %v482
      %802 = vmatprep.subr.mxu0 0.0
      %803 = vmatpush1.msra.mxu0 0.0
      %804 = vmatprep.subr.mxu0 0.0
      %805 = vmatpush1.msra.mxu0 0.0
      %806 = vmatprep.subr.mxu0 0.0
      %807 = vmatpush1.msra.mxu0 0.0
      %808 = vmatprep.subr.mxu0 0.0
      %809 = vmatpush1.msra.mxu0 0.0
      %810 = vmatprep.subr.mxu0 0.0
      %811 = vmatpush1.msra.mxu0 0.0
      %812 = vmatprep.subr.mxu0 0.0
      %813 = vmatpush1.msra.mxu0 0.0
      %814 = vmatprep.subr.mxu0 0.0
      %815 = vmatpush1.msra.mxu0 0.0
      %816 = vmatprep.subr.mxu0 0.0
      %817 = vmatpush1.msra.mxu0 0.0
      %818 = vmatprep.subr.mxu0 0.0
      %819 = vmatpush1.msra.mxu0 0.0
      %820 = vmatprep.subr.mxu0 0.0
      %821 = vmatpush1.msra.mxu0 0.0
      %822 = vmatprep.subr.mxu0 0.0
      %823 = vmatpush1.msra.mxu0 0.0
      %824 = vmatprep.subr.mxu0 0.0
      %825 = vmatpush1.msra.mxu0 0.0
      %826 = vmatprep.subr.mxu0 0.0
      %827 = vmatpush1.msra.mxu0 0.0
      %828 = vmatprep.subr.mxu0 0.0
      %829 = vmatpush1.msra.mxu0 0.0
      %830 = vmatprep.subr.mxu0 0.0
      %831 = vmatpush1.msra.mxu0 0.0
      %832 = vmatprep.subr.mxu0 0.0
      %833 = vmatpush1.msra.mxu0 0.0
      %834 = vmatprep.subr.mxu0 0.0
      %835 = vmatpush1.msra.mxu0 0.0
      %836 = vmatprep.subr.mxu0 0.0
      %837 = vmatpush1.msra.mxu0 0.0
      %838 = vmatprep.subr.mxu0 0.0
      %839 = vmatpush1.msra.mxu0 0.0
      %840 = vmatprep.subr.mxu0 0.0
      %841 = vmatpush1.msra.mxu0 0.0
      %842 = vmatprep.subr.mxu0 0.0
      %843 = vmatpush1.msra.mxu0 0.0
      %844 = vmatprep.subr.mxu0 0.0
      %845 = vmatpush1.msra.mxu0 0.0
      %846 = vmatprep.subr.mxu0 0.0
      %847 = vmatpush1.msra.mxu0 0.0
      %848 = vmatprep.subr.mxu0 0.0
      %849 = vmatpush1.msra.mxu0 0.0
      %850 = vmatprep.subr.mxu0 0.0
      %851 = vmatpush1.msra.mxu0 0.0
      %852 = vmatprep.subr.mxu0 0.0
      %853 = vmatpush1.msra.mxu0 0.0
      %854 = vmatprep.subr.mxu0 0.0
      %855 = vmatpush1.msra.mxu0 0.0
      %856 = vmatprep.subr.mxu0 0.0
      %857 = vmatpush1.msra.mxu0 0.0
      %858 = vmatprep.mubr.f32.mxu0 0.0
      %859 = vmatmul.mubr.f32.gmra.mrb[0].mxu0 %v792
      %v860 = vpop.f32.mrb[0].mxu0
      %v861 = vadd.f32 0.0, %v860
      %v862 = vpop.f32.mrb[0].mxu0
      %863 = vdwg.mxu0
      %v864 = vadd.f32 %v788, %v861
      %v865 = vmul.f32 %v864, 0.5
      %v866 = vtanh.pop %v865
      %v867 = vadd.f32 %v866, 1.0
      %v868 = vmul.f32 %v867, 0.5
      %v869 = vtanh.pop %v864
      %v870 = vmul.f32 %v868, %v780
      %872 = vrot.lane.b32.xlu0 %v869, 64
      %v873 = vpop.permute.xlu0 %872
      %v875 = vmul.f32 %v868, %v873
      %877 = vrot.lane.b32.xlu0 %v875, 32
      %v878 = vpop.permute.xlu0 %877
      %v880 = vadd.f32 %v870, %v878
      %v881 = vtanh.pop %v880
      %883 = vrot.lane.b32.xlu0 %v881, 64
      %v884 = vpop.permute.xlu0 %883
      %v886 = vmul.f32 %v868, %v884
      %888 = vrot.lane.b32.xlu0 %v886, 32
      %v889 = vpop.permute.xlu0 %888
      %891 = vst.msk [vmem:[#allocation3] sm:$0xff] %vm486, %v889
      %893 = vrot.lane.b32.xlu0 %v880, 96
      %v894 = vpop.permute.xlu0 %893
      %896 = vst.msk [vmem:[#allocation4] sm:$0xff] %vm486, %v894
      %897 = vst.msk [vmem:[%s342] sm:$0xff] %vm486, %v889
      %898 = vst.msk [vmem:[%s346] sm:$0xff] %vm486, %v894
      %p899 = scmp.lt.s32.totalorder %s23, 0
      %s900 = scalar_select %p899, %s23, 0
      %s901 = smul.addr %s900, 8
      %s902 = scalar_lea.vmem %s6, %s901
      %p903 = scmp.lt.s32.totalorder %s23, 0
      %s904 = scalar_select %p903, %s23, 0
      %s905 = smul.addr %s904, 8
      %s906 = scalar_lea.vmem %s7, %s905
      // Predicated region
      $region49: #{decoder_rnn_forward.1} parent=43 // pred_check
        %p907 = pneg %p192
      $region50: #{decoder_rnn_forward.1} parent=43 // pred_check_branch
        %909 = sbr.rel (%p907) target = $region52
      $region51: #{decoder_rnn_forward.1} parent=43 // pred_region
        _
      $region52: #{decoder_rnn_forward.1} parent=43 // pred_fallthru
        _
      // Predicated region
      $region53: #{decoder_rnn_forward.1} parent=43 // pred_check
        %p910 = pneg %p218
      $region54: #{decoder_rnn_forward.1} parent=43 // pred_check_branch
        %912 = sbr.rel (%p910) target = $region56
      $region55: #{decoder_rnn_forward.1} parent=43 // pred_region
        _
      $region56: #{decoder_rnn_forward.1} parent=43 // pred_fallthru
        _
      // Predicated region
      $region57: #{decoder_rnn_forward.1} parent=43 // pred_check
        %p913 = pneg %p192
      $region58: #{decoder_rnn_forward.1} parent=43 // pred_check_branch
        %915 = sbr.rel (%p913) target = $region60
      $region59: #{decoder_rnn_forward.1} parent=43 // pred_region
        %p916 = scmp.lt.s32.totalorder %s23, 0
        %s917 = scalar_select %p916, %s23, 0
        %s918 = smul.addr %s917, 8
        %s919 = scalar_lea.vmem %s6, %s918
      $region60: #{decoder_rnn_forward.1} parent=43 // pred_fallthru
        _
      // Predicated region
      $region61: #{decoder_rnn_forward.1} parent=43 // pred_check
        %p920 = pneg %p218
      $region62: #{decoder_rnn_forward.1} parent=43 // pred_check_branch
        %922 = sbr.rel (%p920) target = $region64
      $region63: #{decoder_rnn_forward.1} parent=43 // pred_region
        %p923 = scmp.lt.s32.totalorder %s23, 0
        %s924 = scalar_select %p923, %s23, 0
        %s925 = smul.addr %s924, 8
        %s926 = scalar_lea.vmem %s7, %s925
      $region64: #{decoder_rnn_forward.1} parent=43 // pred_fallthru
        _
    $region44: #{decoder_rnn_forward.1} parent=5 // pred_fallthru
      _
    %p927 = scmp.le.s32.totalorder 2, %s14
    // Predicated region
    $region65: #{decoder_rnn_forward.1} parent=5 // pred_check
      %p928 = pneg %p927
    $region66: #{decoder_rnn_forward.1} parent=5 // pred_check_branch
      %930 = sbr.rel (%p928) target = $region68
    $region67: #{decoder_rnn_forward.1} parent=5 // pred_region
      %s931 = ssub.s32 %s14, 2
    $region68: #{decoder_rnn_forward.1} parent=5 // pred_fallthru
      _
  $region6: #{decoder_rnn_forward.1} parent=0 // loop_footer
    %s18 = sadd.s32 1, %s14
  $region7: #{decoder_rnn_forward.1} parent=0 // loop_footer_branch
    %13 = sbr.rel target = $region3
  $region8: #{decoder_rnn_forward.1} parent=0 // loop_exit
    _

</llo_original>
